<compile_context>
chip_gen: v7x
topology: tpu7x:2x2x1
jax: 0.10.0
libtpu: 0.0.40
codegen_flags: <defaults>
</compile_context>

<pallas_src>
import functools

import jax
import jax.numpy as jnp
from jax import lax
from jax.experimental import pallas as pl
from jax.experimental.pallas import tpu as pltpu

_VMEM_LIMIT = 32 * 1024 * 1024      # explicit scoped-VMEM cap (safe on v5e..v7x)
_VMEM_BUDGET = 16 * 1024 * 1024     # target for our own padded-block estimate
_MODE_CACHE = {}                    # (shape, dtype, r, n_out) -> "fused"|"phase"


# --------------------------------------------------------------------------
# Kernels
# --------------------------------------------------------------------------
def _make_fused_kernel(n_out, n_cin, r):
    """Pointwise conv + tanh/2 with the pixel shuffle folded into the stores."""
    r2 = r * r

    def kernel(w_ref, x_ref, o_ref):
        # w_ref : SMEM (n_out, n_cin) float32      -- 1x1 conv weight
        # x_ref : VMEM (1, n_cin*r2, TH, W)        -- original (pre-shuffle) channels
        # o_ref : VMEM (1, n_out, TH*r, W*r)       -- shuffled, activated output
        th = x_ref.shape[2]
        w = x_ref.shape[3]
        accs = [None] * n_out
        # c outermost: load + cast each input channel group exactly once.
        for c in range(n_cin):
            xc = x_ref[0, c * r2:(c + 1) * r2, :, :].astype(jnp.float32)  # (r2,TH,W)
            for o in range(n_out):
                t = w_ref[o, c] * xc
                accs[o] = t if accs[o] is None else accs[o] + t
        for o in range(n_out):
            act = jnp.tanh(accs[o]) * 0.5                        # (r2, TH, W) f32
            t = act.reshape(r, r, th, w)                         # t[i, j, h, w]
            t = jnp.transpose(t, (2, 0, 3, 1))                   # (TH, r, W, r)
            o_ref[0, o, :, :] = t.reshape(th * r, w * r).astype(o_ref.dtype)

    return kernel


def _make_phase_kernel(n_out, n_cin, r2):
    """Pointwise conv + tanh/2, phase-major output (shuffle done later in XLA)."""

    def kernel(w_ref, x_ref, o_ref):
        # w_ref : SMEM (n_out, n_cin) float32
        # x_ref : VMEM (1, n_cin*r2, TH, W)
        # o_ref : VMEM (1, n_out*r2, TH, W)
        accs = [None] * n_out
        for c in range(n_cin):
            xc = x_ref[0, c * r2:(c + 1) * r2, :, :].astype(jnp.float32)
            for o in range(n_out):
                t = w_ref[o, c] * xc
                accs[o] = t if accs[o] is None else accs[o] + t
        for o in range(n_out):
            o_ref[0, o * r2:(o + 1) * r2, :, :] = (jnp.tanh(accs[o]) * 0.5).astype(
                o_ref.dtype)

    return kernel


# --------------------------------------------------------------------------
# Helpers
# --------------------------------------------------------------------------
def pixel_shuffle(x, r):
    """NCHW pixel shuffle, identical to torch.nn.functional.pixel_shuffle."""
    n, crr, h, w = x.shape
    c = crr // (r * r)
    x = x.reshape(n, c, r, r, h, w)
    x = jnp.transpose(x, (0, 1, 4, 2, 5, 3))  # N, C, H, r, W, r
    return x.reshape(n, c, h * r, w * r)


def _round_up(v, m):
    return (v + m - 1) // m * m


def _choose_row_tile(n, h, w, conv_in, r, in_itemsize, out_itemsize, n_out,
                     budget_bytes=_VMEM_BUDGET):
    """Largest sublane-aligned divisor of H whose padded VMEM footprint fits."""
    r2 = r * r
    sub = 8 * max(1, 4 // max(in_itemsize, 1))   # 8 f32, 16 bf16, 32 int8/fp8
    w_pad_in = _round_up(w, 128)
    w_pad_out = _round_up(w * r, 128)

    def vmem_estimate(th):
        in_blk = conv_in * th * w_pad_in * in_itemsize
        out_fused = n_out * (th * r) * w_pad_out * out_itemsize
        out_phase = n_out * r2 * th * w_pad_in * out_itemsize
        temps = (n_out + 2) * r2 * th * w_pad_in * 4   # f32 accumulators + relayout
        return 2 * in_blk + 2 * max(out_fused, out_phase) + temps

    cands = [t for t in range(sub, h + 1, sub) if h % t == 0]
    feas = [t for t in cands if vmem_estimate(t) <= budget_bytes]
    if feas:
        best = max(feas)
        steps = n * (h // best)
        if steps < 2 or steps % 2:
            even = [t for t in feas if (n * (h // t)) % 2 == 0 and n * (h // t) >= 2]
            if even and max(even) * 2 >= best:
                best = max(even)     # keep v7x megacore balanced, <=2x smaller tile
        return best
    if cands:
        return min(cands)
    # TODO(synk): H not divisible by the sublane packing -> full-H tile; may
    #   exceed VMEM for very large spatial extents (needs ragged-edge handling).
    return h


# --------------------------------------------------------------------------
# pallas_call wrappers (one per path)
# --------------------------------------------------------------------------
@functools.partial(jax.jit, static_argnums=(2, 3))
def _forward_fused(x, w2d, r, th):
    n, conv_in, h, w = x.shape
    r2 = r * r
    cin = conv_in // r2
    n_out = w2d.shape[0]
    grid = (n, h // th)
    return pl.pallas_call(
        _make_fused_kernel(n_out, cin, r),
        out_shape=jax.ShapeDtypeStruct((n, n_out, h * r, w * r), x.dtype),
        grid_spec=pltpu.PrefetchScalarGridSpec(
            num_scalar_prefetch=0,
            grid=grid,
            in_specs=[
                # tiny weight lives in SMEM, read as scalars (no VMEM block / MXU)
                pl.BlockSpec(memory_space=pltpu.MemorySpace.SMEM),
                pl.BlockSpec((1, conv_in, th, w), lambda b, i: (b, 0, i, 0)),
            ],
            out_specs=pl.BlockSpec((1, n_out, th * r, w * r),
                                   lambda b, i: (b, 0, i, 0)),
        ),
        compiler_params=pltpu.CompilerParams(
            dimension_semantics=("parallel", "parallel"),
            vmem_limit_bytes=_VMEM_LIMIT),
    )(w2d, x)


@functools.partial(jax.jit, static_argnums=(2, 3))
def _forward_phase(x, w2d, r, th):
    n, conv_in, h, w = x.shape
    r2 = r * r
    cin = conv_in // r2
    n_out = w2d.shape[0]
    grid = (n, h // th)
    z = pl.pallas_call(
        _make_phase_kernel(n_out, cin, r2),
        out_shape=jax.ShapeDtypeStruct((n, n_out * r2, h, w), x.dtype),
        grid_spec=pltpu.PrefetchScalarGridSpec(
            num_scalar_prefetch=0,
            grid=grid,
            in_specs=[
                pl.BlockSpec(memory_space=pltpu.MemorySpace.SMEM),
                pl.BlockSpec((1, conv_in, th, w), lambda b, i: (b, 0, i, 0)),
            ],
            out_specs=pl.BlockSpec((1, n_out * r2, th, w),
                                   lambda b, i: (b, 0, i, 0)),
        ),
        compiler_params=pltpu.CompilerParams(
            dimension_semantics=("parallel", "parallel"),
            vmem_limit_bytes=_VMEM_LIMIT),
    )(w2d, x)
    # Single output-sized permutation left to XLA (fallback path only).
    return pixel_shuffle(z, r)


# --------------------------------------------------------------------------
# Public entry point
# --------------------------------------------------------------------------
def early_exit_forward(x, conv_weight, shuffle_up):
    """x: [N, conv_in, H, W] (NCHW).  conv_weight: [3, conv_in//r^2, 1, 1]."""
    r = int(shuffle_up)
    r2 = r * r
    n, conv_in, h, w = x.shape
    assert conv_in % r2 == 0, "conv_in must be divisible by shuffle_up**2"
    cin = conv_in // r2
    n_out = conv_weight.shape[0]  # 3
    w2d = conv_weight.reshape(n_out, cin).astype(jnp.float32)

    th = _choose_row_tile(n, h, w, conv_in, r, x.dtype.itemsize,
                          x.dtype.itemsize, n_out)

    key = (tuple(x.shape), str(x.dtype), r, n_out)
    mode = _MODE_CACHE.get(key)
    if mode == "fused":
        return _forward_fused(x, w2d, r, th)
    if mode == "phase":
        return _forward_phase(x, w2d, r, th)

    # First call for this signature: try the shuffle-folded kernel, validate it
    # once against the proven phase-major path, and fall back if the in-register
    # interleave does not lower (or disagrees) on this TPU generation.
    ref = _forward_phase(x, w2d, r, th)
    try:
        out = _forward_fused(x, w2d, r, th)
        ok = bool(jnp.allclose(out, ref, atol=1e-5, rtol=1e-5))
    except Exception:
        out, ok = None, False
    if ok:
        _MODE_CACHE[key] = "fused"
        return out
    _MODE_CACHE[key] = "phase"
    return ref


def early_exit_reference(x, conv_weight, shuffle_up):
    xs = pixel_shuffle(x, shuffle_up)
    c = xs.shape[1]
    w2d = conv_weight.reshape(conv_weight.shape[0], c)
    y = jnp.einsum('nchw,oc->nohw', xs, w2d, precision=lax.Precision.HIGHEST)
    return jnp.tanh(y) / 2


if __name__ == "__main__":
    shuffle_up = 2
    conv_in = 16
    cin = conv_in // shuffle_up ** 2

    key = jax.random.PRNGKey(0)
    kx1, kx2, kw = jax.random.split(key, 3)
    # Conv2d(conv_in // r^2 -> 3, kernel=1, bias=False) weight
    conv_weight = jax.random.normal(kw, (3, cin, 1, 1), dtype=jnp.float32) * 0.1

    # Case 1: wider spatial dims (exercises the fused, shuffle-folded store path).
    x1 = jax.random.normal(kx1, (2, conv_in, 16, 64), dtype=jnp.float32)
    out1 = jax.block_until_ready(early_exit_forward(x1, conv_weight, shuffle_up))
    ref1 = early_exit_reference(x1, conv_weight, shuffle_up)
    assert out1.shape == (2, 3, 32, 128)
    assert jnp.allclose(out1, ref1, atol=1e-5, rtol=1e-5)

    # Case 2: tiny spatial dims.
    x2 = jax.random.normal(kx2, (2, conv_in, 8, 8), dtype=jnp.float32)
    out2 = jax.block_until_ready(early_exit_forward(x2, conv_weight, shuffle_up))
    ref2 = early_exit_reference(x2, conv_weight, shuffle_up)
    assert out2.shape == (2, 3, 16, 16)
    assert jnp.allclose(out2, ref2, atol=1e-5, rtol=1e-5)

    print("KERNEL_OK")
</pallas_src>

<mosaic_0001>
module attributes {stable_mosaic.version = 11 : i64} {
  func.func @kernel(%arg0: i32, %arg1: i32, %arg2: memref<3x4xf32, #tpu.memory_space<smem>>, %arg3: memref<1x16x16x64xf32, #tpu.memory_space<vmem>>, %arg4: memref<1x12x16x64xf32, #tpu.memory_space<vmem>>) attributes {dimension_semantics = [#tpu.dimension_semantics<parallel>, #tpu.dimension_semantics<parallel>], iteration_bounds = array<i64: 2, 1>, scalar_prefetch = 0 : i64, scratch_operands = 0 : i64, tpu.core_type = #tpu.core_type<tc>, window_params = [{transform_indices = @transform_0, window_bounds = array<i64: 3, 4>}, {transform_indices = @transform_1, window_bounds = array<i64: 1, 16, 16, 64>}, {transform_indices = @transform_2, window_bounds = array<i64: 1, 12, 16, 64>}]} {
    %c0 = arith.constant 0 : index
    %c0_0 = arith.constant 0 : index
    %c0_1 = arith.constant 0 : index
    %c0_2 = arith.constant 0 : index
    %0 = vector.load %arg3[%c0, %c0_0, %c0_1, %c0_2] : memref<1x16x16x64xf32, #tpu.memory_space<vmem>>, vector<1x4x16x64xf32>
    %1 = vector.shape_cast %0 : vector<1x4x16x64xf32> to vector<4x16x64xf32>
    %c0_3 = arith.constant 0 : index
    %c0_4 = arith.constant 0 : index
    %2 = memref.load %arg2[%c0_3, %c0_4] : memref<3x4xf32, #tpu.memory_space<smem>>
    %3 = vector.broadcast %2 : f32 to vector<4x16x64xf32>
    %4 = arith.mulf %3, %1 : vector<4x16x64xf32>
    %c1 = arith.constant 1 : index
    %c0_5 = arith.constant 0 : index
    %5 = memref.load %arg2[%c1, %c0_5] : memref<3x4xf32, #tpu.memory_space<smem>>
    %6 = vector.broadcast %5 : f32 to vector<4x16x64xf32>
    %7 = arith.mulf %6, %1 : vector<4x16x64xf32>
    %c2 = arith.constant 2 : index
    %c0_6 = arith.constant 0 : index
    %8 = memref.load %arg2[%c2, %c0_6] : memref<3x4xf32, #tpu.memory_space<smem>>
    %9 = vector.broadcast %8 : f32 to vector<4x16x64xf32>
    %10 = arith.mulf %9, %1 : vector<4x16x64xf32>
    %c0_7 = arith.constant 0 : index
    %c4 = arith.constant 4 : index
    %c0_8 = arith.constant 0 : index
    %c0_9 = arith.constant 0 : index
    %11 = vector.load %arg3[%c0_7, %c4, %c0_8, %c0_9] : memref<1x16x16x64xf32, #tpu.memory_space<vmem>>, vector<1x4x16x64xf32>
    %12 = vector.shape_cast %11 : vector<1x4x16x64xf32> to vector<4x16x64xf32>
    %c0_10 = arith.constant 0 : index
    %c1_11 = arith.constant 1 : index
    %13 = memref.load %arg2[%c0_10, %c1_11] : memref<3x4xf32, #tpu.memory_space<smem>>
    %14 = vector.broadcast %13 : f32 to vector<4x16x64xf32>
    %15 = arith.mulf %14, %12 : vector<4x16x64xf32>
    %16 = arith.addf %4, %15 : vector<4x16x64xf32>
    %c1_12 = arith.constant 1 : index
    %c1_13 = arith.constant 1 : index
    %17 = memref.load %arg2[%c1_12, %c1_13] : memref<3x4xf32, #tpu.memory_space<smem>>
    %18 = vector.broadcast %17 : f32 to vector<4x16x64xf32>
    %19 = arith.mulf %18, %12 : vector<4x16x64xf32>
    %20 = arith.addf %7, %19 : vector<4x16x64xf32>
    %c2_14 = arith.constant 2 : index
    %c1_15 = arith.constant 1 : index
    %21 = memref.load %arg2[%c2_14, %c1_15] : memref<3x4xf32, #tpu.memory_space<smem>>
    %22 = vector.broadcast %21 : f32 to vector<4x16x64xf32>
    %23 = arith.mulf %22, %12 : vector<4x16x64xf32>
    %24 = arith.addf %10, %23 : vector<4x16x64xf32>
    %c0_16 = arith.constant 0 : index
    %c8 = arith.constant 8 : index
    %c0_17 = arith.constant 0 : index
    %c0_18 = arith.constant 0 : index
    %25 = vector.load %arg3[%c0_16, %c8, %c0_17, %c0_18] : memref<1x16x16x64xf32, #tpu.memory_space<vmem>>, vector<1x4x16x64xf32>
    %26 = vector.shape_cast %25 : vector<1x4x16x64xf32> to vector<4x16x64xf32>
    %c0_19 = arith.constant 0 : index
    %c2_20 = arith.constant 2 : index
    %27 = memref.load %arg2[%c0_19, %c2_20] : memref<3x4xf32, #tpu.memory_space<smem>>
    %28 = vector.broadcast %27 : f32 to vector<4x16x64xf32>
    %29 = arith.mulf %28, %26 : vector<4x16x64xf32>
    %30 = arith.addf %16, %29 : vector<4x16x64xf32>
    %c1_21 = arith.constant 1 : index
    %c2_22 = arith.constant 2 : index
    %31 = memref.load %arg2[%c1_21, %c2_22] : memref<3x4xf32, #tpu.memory_space<smem>>
    %32 = vector.broadcast %31 : f32 to vector<4x16x64xf32>
    %33 = arith.mulf %32, %26 : vector<4x16x64xf32>
    %34 = arith.addf %20, %33 : vector<4x16x64xf32>
    %c2_23 = arith.constant 2 : index
    %c2_24 = arith.constant 2 : index
    %35 = memref.load %arg2[%c2_23, %c2_24] : memref<3x4xf32, #tpu.memory_space<smem>>
    %36 = vector.broadcast %35 : f32 to vector<4x16x64xf32>
    %37 = arith.mulf %36, %26 : vector<4x16x64xf32>
    %38 = arith.addf %24, %37 : vector<4x16x64xf32>
    %c0_25 = arith.constant 0 : index
    %c12 = arith.constant 12 : index
    %c0_26 = arith.constant 0 : index
    %c0_27 = arith.constant 0 : index
    %39 = vector.load %arg3[%c0_25, %c12, %c0_26, %c0_27] : memref<1x16x16x64xf32, #tpu.memory_space<vmem>>, vector<1x4x16x64xf32>
    %40 = vector.shape_cast %39 : vector<1x4x16x64xf32> to vector<4x16x64xf32>
    %c0_28 = arith.constant 0 : index
    %c3 = arith.constant 3 : index
    %41 = memref.load %arg2[%c0_28, %c3] : memref<3x4xf32, #tpu.memory_space<smem>>
    %42 = vector.broadcast %41 : f32 to vector<4x16x64xf32>
    %43 = arith.mulf %42, %40 : vector<4x16x64xf32>
    %44 = arith.addf %30, %43 : vector<4x16x64xf32>
    %c1_29 = arith.constant 1 : index
    %c3_30 = arith.constant 3 : index
    %45 = memref.load %arg2[%c1_29, %c3_30] : memref<3x4xf32, #tpu.memory_space<smem>>
    %46 = vector.broadcast %45 : f32 to vector<4x16x64xf32>
    %47 = arith.mulf %46, %40 : vector<4x16x64xf32>
    %48 = arith.addf %34, %47 : vector<4x16x64xf32>
    %c2_31 = arith.constant 2 : index
    %c3_32 = arith.constant 3 : index
    %49 = memref.load %arg2[%c2_31, %c3_32] : memref<3x4xf32, #tpu.memory_space<smem>>
    %50 = vector.broadcast %49 : f32 to vector<4x16x64xf32>
    %51 = arith.mulf %50, %40 : vector<4x16x64xf32>
    %52 = arith.addf %38, %51 : vector<4x16x64xf32>
    %53 = math.tanh %44 : vector<4x16x64xf32>
    %cst = arith.constant 5.000000e-01 : f32
    %54 = vector.broadcast %cst : f32 to vector<4x16x64xf32>
    %55 = arith.mulf %53, %54 : vector<4x16x64xf32>
    %c0_33 = arith.constant 0 : index
    %c0_34 = arith.constant 0 : index
    %c0_35 = arith.constant 0 : index
    %c0_36 = arith.constant 0 : index
    %56 = vector.load %arg4[%c0_33, %c0_34, %c0_35, %c0_36] : memref<1x12x16x64xf32, #tpu.memory_space<vmem>>, vector<1x4x16x64xf32>
    %57 = vector.shape_cast %56 : vector<1x4x16x64xf32> to vector<4x16x64xf32>
    %58 = vector.shape_cast %55 : vector<4x16x64xf32> to vector<1x4x16x64xf32>
    tpu.vector_store %arg4[%c0_33, %c0_34, %c0_35, %c0_36], %58 {strides = array<i32>} : memref<1x12x16x64xf32, #tpu.memory_space<vmem>>, vector<1x4x16x64xf32>,
    %59 = math.tanh %48 : vector<4x16x64xf32>
    %cst_37 = arith.constant 5.000000e-01 : f32
    %60 = vector.broadcast %cst_37 : f32 to vector<4x16x64xf32>
    %61 = arith.mulf %59, %60 : vector<4x16x64xf32>
    %c0_38 = arith.constant 0 : index
    %c4_39 = arith.constant 4 : index
    %c0_40 = arith.constant 0 : index
    %c0_41 = arith.constant 0 : index
    %62 = vector.load %arg4[%c0_38, %c4_39, %c0_40, %c0_41] : memref<1x12x16x64xf32, #tpu.memory_space<vmem>>, vector<1x4x16x64xf32>
    %63 = vector.shape_cast %62 : vector<1x4x16x64xf32> to vector<4x16x64xf32>
    %64 = vector.shape_cast %61 : vector<4x16x64xf32> to vector<1x4x16x64xf32>
    tpu.vector_store %arg4[%c0_38, %c4_39, %c0_40, %c0_41], %64 {strides = array<i32>} : memref<1x12x16x64xf32, #tpu.memory_space<vmem>>, vector<1x4x16x64xf32>,
    %65 = math.tanh %52 : vector<4x16x64xf32>
    %cst_42 = arith.constant 5.000000e-01 : f32
    %66 = vector.broadcast %cst_42 : f32 to vector<4x16x64xf32>
    %67 = arith.mulf %65, %66 : vector<4x16x64xf32>
    %c0_43 = arith.constant 0 : index
    %c8_44 = arith.constant 8 : index
    %c0_45 = arith.constant 0 : index
    %c0_46 = arith.constant 0 : index
    %68 = vector.load %arg4[%c0_43, %c8_44, %c0_45, %c0_46] : memref<1x12x16x64xf32, #tpu.memory_space<vmem>>, vector<1x4x16x64xf32>
    %69 = vector.shape_cast %68 : vector<1x4x16x64xf32> to vector<4x16x64xf32>
    %70 = vector.shape_cast %67 : vector<4x16x64xf32> to vector<1x4x16x64xf32>
    tpu.vector_store %arg4[%c0_43, %c8_44, %c0_45, %c0_46], %70 {strides = array<i32>} : memref<1x12x16x64xf32, #tpu.memory_space<vmem>>, vector<1x4x16x64xf32>,
    return
  }
  func.func @transform_0(%arg0: i32, %arg1: i32) -> (i32, i32) {
    %c0_i32 = arith.constant 0 : i32
    %c0_i32_0 = arith.constant 0 : i32
    %c0_i32_1 = arith.constant 0 : i32
    return %c0_i32, %c0_i32_0 : i32, i32
  }
  func.func @transform_1(%arg0: i32, %arg1: i32) -> (i32, i32, i32, i32) {
    %c0_i32 = arith.constant 0 : i32
    %c0_i32_0 = arith.constant 0 : i32
    %c0_i32_1 = arith.constant 0 : i32
    return %arg0, %c0_i32, %arg1, %c0_i32_0 : i32, i32, i32, i32
  }
  func.func @transform_2(%arg0: i32, %arg1: i32) -> (i32, i32, i32, i32) {
    %c0_i32 = arith.constant 0 : i32
    %c0_i32_0 = arith.constant 0 : i32
    %c0_i32_1 = arith.constant 0 : i32
    return %arg0, %c0_i32, %arg1, %c0_i32_0 : i32, i32, i32, i32
  }
}

</mosaic_0001>

<llo_original>
// kernel: _forward_phase.1
$region0: #{_forward_phase.1}
  #allocation0 [shape = 'u32[]', space=smem, size = 0x4, offset = 0x4, fixed_abs, tag = 'smem constant byte address 0x4 - core index']
  #allocation1 [shape = 'u32[144,128]{1,0:T(1,128)}', space=vmem, size = 0x12000, scoped, tag = 'internal scratch']
  %s0 = inlined_call_operand.hbm [shape: f32[3,4], index: 0, kind: input, shape index: {}]
  %s1 = inlined_call_operand.hbm [shape: f32[2,16,16,64], index: 1, kind: input, shape index: {}]
  %s2 = inlined_call_operand.vmem [shape: f32[2,12,16,64], index: 2, kind: output, shape index: {}]
  %s3 = sld [smem:[#allocation0]]
  $region49: #{_forward_phase.1} parent=0
    _
  %s5 = ssub.s32 1, %s3
  %s6 = scalar_select 0, %s5, %s3
  $region1: #{_forward_phase.1} parent=0
    #allocation2 [shape = 'u8[2048]{0}', space=smem, size = 0x800, scoped, tag = 'input window, operand 0, single buffered']
    #allocation3 [shape = 's32[2]{0}', space=sflag, size = 0x8, scoped, tag = 'scoped memory for _forward_phase.1']
    #allocation4 [shape = 's32[2]{0}', space=sflag, size = 0x8, scoped, tag = 'scoped memory for _forward_phase.1']
    #allocation5 [shape = 'u8[262144]{0}', space=vmem, size = 0x40000, scoped, tag = 'input window, operand 1']
    %7 = vsyncpa [#allocation4], 0
    %8 = vsyncpa [#allocation3], 0
    %s9 = scalar_lea.sflag [#allocation3], 1
    %10 = vsyncpa %s9, 0
    loop: start=0, step=1, limit=4
    $region2: #{_forward_phase.1} parent=1 // loop_pre_header
      _
    $region3: #{_forward_phase.1} parent=1 // loop_header
      %s12 = sphi 0, %s16
      %p13 = scmp.ge.s32.totalorder %s12, 4
      %s19 = sphi 0, %s31
      %s20 = sphi 0, %s27
      %s21 = sphi 0, %s19
      %s22 = sphi 0, %s20
      %s23 = sphi 0, %s21
      %s24 = sphi 0, %s22
      %s32 = sphi 0, %s32
      %s34 = sphi 0, %s32
      %s35 = sphi 0, %s34
      %s49 = sphi 0, %s35
      %s57 = sphi 0, %s59
      %s60 = sphi 0, %s57
      %s61 = sphi 0, %s60
      %s77 = sphi 0, %s61
      %s85 = sphi 0, %s87
      %s88 = sphi 0, %s85
      %s89 = sphi 0, %s88
      %s105 = sphi 0, %s89
    $region4: #{_forward_phase.1} parent=1 // loop_header_branch
      %15 = sbr.rel (%p13) target = $region8
    $region5: #{_forward_phase.1} parent=1 // loop_body
      %s17 = ssub.s32 %s12, 1
      %s18 = ssub.s32 %s12, 2
      %s25 = sadd.s32 1, %s20
      %p26 = scmp.ge.s32.totalorder %s25, 1
      %s27 = scalar_select %p26, 0, %s25
      %s28 = sadd.s32 1, %s19
      %s29 = scalar_select %p26, %s28, %s19
      %p30 = scmp.ge.s32.totalorder %s29, 2
      %s31 = scalar_select %p30, 0, %s29
      %s33 = sadd.s32 %s32, 1
      %p36 = scmp.eq.s32.totalorder %s12, 1
      %p37 = scmp.ne.s32.totalorder %s32, %s34
      %p38 = scmp.eq.s32.totalorder %s12, 0
      %p39 = por %p37, %p38
      %p40 = scmp.ne.s32.totalorder %s32, %s34
      %p41 = scmp.eq.s32.totalorder %s17, 1
      %p42 = por %p40, %p41
      %p43 = scmp.ne.s32.totalorder %s34, %s35
      %p44 = scmp.eq.s32.totalorder %s17, 0
      %p45 = por %p43, %p44
      %p46 = scmp.ne.s32.totalorder %s34, %s35
      %p47 = scmp.eq.s32.totalorder %s18, 1
      %p48 = por %p46, %p47
      %p50 = scmp.ne.s32.totalorder %s35, %s49
      %p51 = scmp.eq.s32.totalorder %s18, 0
      %p52 = por %p50, %p51
      %s53 = ssub.s32 %s19, %s31
      %s54 = ssub.s32 %s20, %s27
      %s55 = sor.u32 %s53, %s54
      %p56 = scmp.eq.s32.totalorder %s55, 0
      %s58 = sadd.s32 %s57, 1
      %s59 = scalar_select %p56, %s57, %s58
      %p62 = pneg %p56
      %p63 = scmp.eq.s32.totalorder %s12, 1
      %p64 = por %p62, %p63
      %p65 = scmp.ne.s32.totalorder %s57, %s60
      %p66 = scmp.eq.s32.totalorder %s12, 0
      %p67 = por %p65, %p66
      %p68 = scmp.ne.s32.totalorder %s57, %s60
      %p69 = scmp.eq.s32.totalorder %s17, 1
      %p70 = por %p68, %p69
      %p71 = scmp.ne.s32.totalorder %s60, %s61
      %p72 = scmp.eq.s32.totalorder %s17, 0
      %p73 = por %p71, %p72
      %p74 = scmp.ne.s32.totalorder %s60, %s61
      %p75 = scmp.eq.s32.totalorder %s18, 1
      %p76 = por %p74, %p75
      %p78 = scmp.ne.s32.totalorder %s61, %s77
      %p79 = scmp.eq.s32.totalorder %s18, 0
      %p80 = por %p78, %p79
      %s81 = ssub.s32 %s19, %s31
      %s82 = ssub.s32 %s20, %s27
      %s83 = sor.u32 %s81, %s82
      %p84 = scmp.eq.s32.totalorder %s83, 0
      %s86 = sadd.s32 %s85, 1
      %s87 = scalar_select %p84, %s85, %s86
      %p90 = pneg %p84
      %p91 = scmp.eq.s32.totalorder %s12, 1
      %p92 = por %p90, %p91
      %p93 = scmp.ne.s32.totalorder %s85, %s88
      %p94 = scmp.eq.s32.totalorder %s12, 0
      %p95 = por %p93, %p94
      %p96 = scmp.ne.s32.totalorder %s85, %s88
      %p97 = scmp.eq.s32.totalorder %s17, 1
      %p98 = por %p96, %p97
      %p99 = scmp.ne.s32.totalorder %s88, %s89
      %p100 = scmp.eq.s32.totalorder %s17, 0
      %p101 = por %p99, %p100
      %p102 = scmp.ne.s32.totalorder %s88, %s89
      %p103 = scmp.eq.s32.totalorder %s18, 1
      %p104 = por %p102, %p103
      %p106 = scmp.ne.s32.totalorder %s89, %s105
      %p107 = scmp.eq.s32.totalorder %s18, 0
      %p108 = por %p106, %p107
      %p109 = scmp.le.s32.totalorder 1, %s12
      %p110 = scmp.lt.s32.totalorder %s12, 3
      %p111 = pnand %p109, %p110
      %p112 = pneg %p111
      // Predicated region
      $region9: #{_forward_phase.1} parent=5 // pred_check
        _
      $region10: #{_forward_phase.1} parent=5 // pred_check_branch
        %114 = sbr.rel (%p111) target = $region12
      $region11: #{_forward_phase.1} parent=5 // pred_region
        %s115 = ssub.s32 %s12, 1
        // Predicated region
        $region13: #{_forward_phase.1} parent=11 // pred_check
          %p116 = pneg %p45
        $region14: #{_forward_phase.1} parent=11 // pred_check_branch
          %118 = sbr.rel (%p116) target = $region16
        $region15: #{_forward_phase.1} parent=11 // pred_region
          %s120 = ssub.s32 64, 64
          %121 = vsyncadd [#allocation4], %s120
          %124 = dma.hbm_to_smem %s0, 64, [#allocation2], [#allocation4]
        $region16: #{_forward_phase.1} parent=11 // pred_fallthru
          _
      $region12: #{_forward_phase.1} parent=5 // pred_fallthru
        _
      %p125 = scmp.lt.s32.totalorder %s12, 2
      // Predicated region
      $region17: #{_forward_phase.1} parent=5 // pred_check
        %p126 = pneg %p125
      $region18: #{_forward_phase.1} parent=5 // pred_check_branch
        %128 = sbr.rel (%p126) target = $region20
      $region19: #{_forward_phase.1} parent=5 // pred_region
        // Predicated region
        $region21: #{_forward_phase.1} parent=19 // pred_check
          %p129 = pneg %p67
        $region22: #{_forward_phase.1} parent=19 // pred_check_branch
          %131 = sbr.rel (%p129) target = $region24
        $region23: #{_forward_phase.1} parent=19 // pred_region
          %s132 = sand.u32 %s57, 1
          %s133 = scalar_lea.sflag [#allocation3], %s132
          %s134 = sand.u32 %s57, 1
          %s135 = smul.addr %s134, 256
          %s136 = scalar_lea.vmem [#allocation5], %s135
          %s137 = smul.u32 2, %s20
          %s139 = ssub.s32 4096, 4096
          %140 = vsyncadd %s133, %s139
          %s141 = smul.addr %s19, 32
          %s142 = sadd.s32 %s137, %s141
          %s143 = smul.addr %s142, 128
          %s144 = scalar_lea.hbm %s1, %s143
          %s145 = sshll.u32 %s136, 4
          %s146 = int_to_ptr.vmem [resolvable:$true] %s145
          %151 = dma.hbm_to_vmem [thread:$0]  %s144, 4096, %s146, %s133, 128, 128, 8
        $region24: #{_forward_phase.1} parent=19 // pred_fallthru
          _
      $region20: #{_forward_phase.1} parent=5 // pred_fallthru
        _
      %p152 = scmp.le.s32.totalorder 1, %s12
      %p153 = scmp.lt.s32.totalorder %s12, 3
      %p154 = pnand %p152, %p153
      %p155 = pneg %p154
      // Predicated region
      $region25: #{_forward_phase.1} parent=5 // pred_check
        _
      $region26: #{_forward_phase.1} parent=5 // pred_check_branch
        %157 = sbr.rel (%p154) target = $region28
      $region27: #{_forward_phase.1} parent=5 // pred_region
        %s158 = ssub.s32 %s12, 1
        // Predicated region
        $region29: #{_forward_phase.1} parent=27 // pred_check
          %p159 = pneg %p45
        $region30: #{_forward_phase.1} parent=27 // pred_check_branch
          %161 = sbr.rel (%p159) target = $region32
        $region31: #{_forward_phase.1} parent=27 // pred_region
          %162 = dma.done [#allocation4], 64
        $region32: #{_forward_phase.1} parent=27 // pred_fallthru
          _
        %s163 = sand.u32 %s60, 1
        %s164 = scalar_lea.sflag [#allocation3], %s163
        %s165 = sand.u32 %s60, 1
        %s166 = smul.addr %s165, 256
        %s167 = scalar_lea.vmem [#allocation5], %s166
        // Predicated region
        $region33: #{_forward_phase.1} parent=27 // pred_check
          %p168 = pneg %p73
        $region34: #{_forward_phase.1} parent=27 // pred_check_branch
          %170 = sbr.rel (%p168) target = $region36
        $region35: #{_forward_phase.1} parent=27 // pred_region
          %171 = dma.done %s164, 4096
        $region36: #{_forward_phase.1} parent=27 // pred_fallthru
          _
        %172 = sfence
        %p173 = pneg %p45
        %p174 = pneg %p42
        %s175 = sand.u32 %s60, 1
        %s176 = scalar_lea.sflag [#allocation3], %s175
        %s177 = sand.u32 %s60, 1
        %s178 = smul.addr %s177, 256
        %s179 = scalar_lea.vmem [#allocation5], %s178
        %p180 = pneg %p73
        %p181 = pneg %p70
        %p182 = pneg %p101
        %p183 = pneg %p98
        %s184 = smul.u32 2, %s22
        %p185 = scmp.lt.s32.totalorder %s21, 1
        %s186 = scalar_select %p185, %s21, 1
        %p187 = scmp.lt.s32.totalorder %s184, 1
        %s188 = scalar_select %p187, %s184, 1
        %s189 = smul.addr %s186, 24
        %s190 = sadd.s32 %s188, %s189
        %s191 = smul.addr %s190, 8
        %s192 = scalar_lea.vmem %s2, %s191
        %s193 = smul.u32 2, %s22
        %s194 = smul.u32 2, %s22
        %p195 = scmp.lt.s32.totalorder %s21, 1
        %s196 = scalar_select %p195, %s21, 1
        %p197 = scmp.lt.s32.totalorder %s194, 1
        %s198 = scalar_select %p197, %s194, 1
        %s199 = smul.addr %s196, 24
        %s200 = sadd.s32 %s198, %s199
        %s201 = smul.addr %s200, 8
        %s202 = scalar_lea.vmem %s2, %s201
        %s203 = smul.u32 2, %s22
        %v204 = vld [vmem:[%s167] sm:$0xff]
        %v205 = vld [vmem:[%s167 + $0x8] sm:$0xff]
        %v206 = vld [vmem:[%s167 + $0x10] sm:$0xff]
        %v207 = vld [vmem:[%s167 + $0x18] sm:$0xff]
        %v208 = vld [vmem:[%s167 + $0x20] sm:$0xff]
        %v209 = vld [vmem:[%s167 + $0x28] sm:$0xff]
        %v210 = vld [vmem:[%s167 + $0x30] sm:$0xff]
        %v211 = vld [vmem:[%s167 + $0x38] sm:$0xff]
        %s212 = sld [smem:[#allocation2]]
        %v213 = vstv %s212
        %v214 = vmul.f32 %v213, %v204
        %v215 = vmul.f32 %v213, %v205
        %v216 = vmul.f32 %v213, %v206
        %v217 = vmul.f32 %v213, %v207
        %v218 = vmul.f32 %v213, %v208
        %v219 = vmul.f32 %v213, %v209
        %v220 = vmul.f32 %v213, %v210
        %v221 = vmul.f32 %v213, %v211
        %s222 = sld [smem:[#allocation2 + $0x80]]
        %v223 = vstv %s222
        %v224 = vmul.f32 %v223, %v204
        %v225 = vmul.f32 %v223, %v205
        %v226 = vmul.f32 %v223, %v206
        %v227 = vmul.f32 %v223, %v207
        %v228 = vmul.f32 %v223, %v208
        %v229 = vmul.f32 %v223, %v209
        %v230 = vmul.f32 %v223, %v210
        %v231 = vmul.f32 %v223, %v211
        %s232 = sld [smem:[#allocation2 + $0x100]]
        %v233 = vstv %s232
        %v234 = vmul.f32 %v233, %v204
        %v235 = vmul.f32 %v233, %v205
        %v236 = vmul.f32 %v233, %v206
        %v237 = vmul.f32 %v233, %v207
        %v238 = vmul.f32 %v233, %v208
        %v239 = vmul.f32 %v233, %v209
        %v240 = vmul.f32 %v233, %v210
        %v241 = vmul.f32 %v233, %v211
        %s242 = scalar_lea.vmem %s167, 64 [#allocation5]
        %v243 = vld [vmem:[%s242] sm:$0xff]
        %v244 = vld [vmem:[%s242 + $0x8] sm:$0xff]
        %v245 = vld [vmem:[%s242 + $0x10] sm:$0xff]
        %v246 = vld [vmem:[%s242 + $0x18] sm:$0xff]
        %v247 = vld [vmem:[%s242 + $0x20] sm:$0xff]
        %v248 = vld [vmem:[%s242 + $0x28] sm:$0xff]
        %v249 = vld [vmem:[%s242 + $0x30] sm:$0xff]
        %v250 = vld [vmem:[%s242 + $0x38] sm:$0xff]
        %s251 = sld [smem:[#allocation2 + $0x1]]
        %v252 = vstv %s251
        %v253 = vmul.f32 %v252, %v243
        %v254 = vmul.f32 %v252, %v244
        %v255 = vmul.f32 %v252, %v245
        %v256 = vmul.f32 %v252, %v246
        %v257 = vmul.f32 %v252, %v247
        %v258 = vmul.f32 %v252, %v248
        %v259 = vmul.f32 %v252, %v249
        %v260 = vmul.f32 %v252, %v250
        %v261 = vadd.f32 %v214, %v253
        %v262 = vadd.f32 %v215, %v254
        %v263 = vadd.f32 %v216, %v255
        %v264 = vadd.f32 %v217, %v256
        %v265 = vadd.f32 %v218, %v257
        %v266 = vadd.f32 %v219, %v258
        %v267 = vadd.f32 %v220, %v259
        %v268 = vadd.f32 %v221, %v260
        %s269 = sld [smem:[#allocation2 + $0x81]]
        %v270 = vstv %s269
        %v271 = vmul.f32 %v270, %v243
        %v272 = vmul.f32 %v270, %v244
        %v273 = vmul.f32 %v270, %v245
        %v274 = vmul.f32 %v270, %v246
        %v275 = vmul.f32 %v270, %v247
        %v276 = vmul.f32 %v270, %v248
        %v277 = vmul.f32 %v270, %v249
        %v278 = vmul.f32 %v270, %v250
        %v279 = vadd.f32 %v224, %v271
        %v280 = vadd.f32 %v225, %v272
        %v281 = vadd.f32 %v226, %v273
        %v282 = vadd.f32 %v227, %v274
        %v283 = vadd.f32 %v228, %v275
        %v284 = vadd.f32 %v229, %v276
        %v285 = vadd.f32 %v230, %v277
        %v286 = vadd.f32 %v231, %v278
        %s287 = sld [smem:[#allocation2 + $0x101]]
        %v288 = vstv %s287
        %v289 = vmul.f32 %v288, %v243
        %v290 = vmul.f32 %v288, %v244
        %v291 = vmul.f32 %v288, %v245
        %v292 = vmul.f32 %v288, %v246
        %v293 = vmul.f32 %v288, %v247
        %v294 = vmul.f32 %v288, %v248
        %v295 = vmul.f32 %v288, %v249
        %v296 = vmul.f32 %v288, %v250
        %v297 = vadd.f32 %v234, %v289
        %v298 = vadd.f32 %v235, %v290
        %v299 = vadd.f32 %v236, %v291
        %v300 = vadd.f32 %v237, %v292
        %v301 = vadd.f32 %v238, %v293
        %v302 = vadd.f32 %v239, %v294
        %v303 = vadd.f32 %v240, %v295
        %v304 = vadd.f32 %v241, %v296
        %s305 = scalar_lea.vmem %s167, 128 [#allocation5]
        %v306 = vld [vmem:[%s305] sm:$0xff]
        %v307 = vld [vmem:[%s305 + $0x8] sm:$0xff]
        %v308 = vld [vmem:[%s305 + $0x10] sm:$0xff]
        %v309 = vld [vmem:[%s305 + $0x18] sm:$0xff]
        %v310 = vld [vmem:[%s305 + $0x20] sm:$0xff]
        %v311 = vld [vmem:[%s305 + $0x28] sm:$0xff]
        %v312 = vld [vmem:[%s305 + $0x30] sm:$0xff]
        %v313 = vld [vmem:[%s305 + $0x38] sm:$0xff]
        %s314 = sld [smem:[#allocation2 + $0x2]]
        %v315 = vstv %s314
        %v316 = vmul.f32 %v315, %v306
        %v317 = vmul.f32 %v315, %v307
        %v318 = vmul.f32 %v315, %v308
        %v319 = vmul.f32 %v315, %v309
        %v320 = vmul.f32 %v315, %v310
        %v321 = vmul.f32 %v315, %v311
        %v322 = vmul.f32 %v315, %v312
        %v323 = vmul.f32 %v315, %v313
        %v324 = vadd.f32 %v261, %v316
        %v325 = vadd.f32 %v262, %v317
        %v326 = vadd.f32 %v263, %v318
        %v327 = vadd.f32 %v264, %v319
        %v328 = vadd.f32 %v265, %v320
        %v329 = vadd.f32 %v266, %v321
        %v330 = vadd.f32 %v267, %v322
        %v331 = vadd.f32 %v268, %v323
        %s332 = sld [smem:[#allocation2 + $0x82]]
        %v333 = vstv %s332
        %v334 = vmul.f32 %v333, %v306
        %v335 = vmul.f32 %v333, %v307
        %v336 = vmul.f32 %v333, %v308
        %v337 = vmul.f32 %v333, %v309
        %v338 = vmul.f32 %v333, %v310
        %v339 = vmul.f32 %v333, %v311
        %v340 = vmul.f32 %v333, %v312
        %v341 = vmul.f32 %v333, %v313
        %v342 = vadd.f32 %v279, %v334
        %v343 = vadd.f32 %v280, %v335
        %v344 = vadd.f32 %v281, %v336
        %v345 = vadd.f32 %v282, %v337
        %v346 = vadd.f32 %v283, %v338
        %v347 = vadd.f32 %v284, %v339
        %v348 = vadd.f32 %v285, %v340
        %v349 = vadd.f32 %v286, %v341
        %s350 = sld [smem:[#allocation2 + $0x102]]
        %v351 = vstv %s350
        %v352 = vmul.f32 %v351, %v306
        %v353 = vmul.f32 %v351, %v307
        %v354 = vmul.f32 %v351, %v308
        %v355 = vmul.f32 %v351, %v309
        %v356 = vmul.f32 %v351, %v310
        %v357 = vmul.f32 %v351, %v311
        %v358 = vmul.f32 %v351, %v312
        %v359 = vmul.f32 %v351, %v313
        %v360 = vadd.f32 %v297, %v352
        %v361 = vadd.f32 %v298, %v353
        %v362 = vadd.f32 %v299, %v354
        %v363 = vadd.f32 %v300, %v355
        %v364 = vadd.f32 %v301, %v356
        %v365 = vadd.f32 %v302, %v357
        %v366 = vadd.f32 %v303, %v358
        %v367 = vadd.f32 %v304, %v359
        %s368 = scalar_lea.vmem %s167, 192 [#allocation5]
        %v369 = vld [vmem:[%s368] sm:$0xff]
        %v370 = vld [vmem:[%s368 + $0x8] sm:$0xff]
        %v371 = vld [vmem:[%s368 + $0x10] sm:$0xff]
        %v372 = vld [vmem:[%s368 + $0x18] sm:$0xff]
        %v373 = vld [vmem:[%s368 + $0x20] sm:$0xff]
        %v374 = vld [vmem:[%s368 + $0x28] sm:$0xff]
        %v375 = vld [vmem:[%s368 + $0x30] sm:$0xff]
        %v376 = vld [vmem:[%s368 + $0x38] sm:$0xff]
        %s377 = sld [smem:[#allocation2 + $0x3]]
        %v378 = vstv %s377
        %v379 = vmul.f32 %v378, %v369
        %v380 = vmul.f32 %v378, %v370
        %v381 = vmul.f32 %v378, %v371
        %v382 = vmul.f32 %v378, %v372
        %v383 = vmul.f32 %v378, %v373
        %v384 = vmul.f32 %v378, %v374
        %v385 = vmul.f32 %v378, %v375
        %v386 = vmul.f32 %v378, %v376
        %v387 = vadd.f32 %v324, %v379
        %v388 = vadd.f32 %v325, %v380
        %v389 = vadd.f32 %v326, %v381
        %v390 = vadd.f32 %v327, %v382
        %v391 = vadd.f32 %v328, %v383
        %v392 = vadd.f32 %v329, %v384
        %v393 = vadd.f32 %v330, %v385
        %v394 = vadd.f32 %v331, %v386
        %s395 = sld [smem:[#allocation2 + $0x83]]
        %v396 = vstv %s395
        %v397 = vmul.f32 %v396, %v369
        %v398 = vmul.f32 %v396, %v370
        %v399 = vmul.f32 %v396, %v371
        %v400 = vmul.f32 %v396, %v372
        %v401 = vmul.f32 %v396, %v373
        %v402 = vmul.f32 %v396, %v374
        %v403 = vmul.f32 %v396, %v375
        %v404 = vmul.f32 %v396, %v376
        %v405 = vadd.f32 %v342, %v397
        %v406 = vadd.f32 %v343, %v398
        %v407 = vadd.f32 %v344, %v399
        %v408 = vadd.f32 %v345, %v400
        %v409 = vadd.f32 %v346, %v401
        %v410 = vadd.f32 %v347, %v402
        %v411 = vadd.f32 %v348, %v403
        %v412 = vadd.f32 %v349, %v404
        %s413 = sld [smem:[#allocation2 + $0x103]]
        %v414 = vstv %s413
        %v415 = vmul.f32 %v414, %v369
        %v416 = vmul.f32 %v414, %v370
        %v417 = vmul.f32 %v414, %v371
        %v418 = vmul.f32 %v414, %v372
        %v419 = vmul.f32 %v414, %v373
        %v420 = vmul.f32 %v414, %v374
        %v421 = vmul.f32 %v414, %v375
        %v422 = vmul.f32 %v414, %v376
        %v423 = vadd.f32 %v360, %v415
        %v424 = vadd.f32 %v361, %v416
        %v425 = vadd.f32 %v362, %v417
        %v426 = vadd.f32 %v363, %v418
        %v427 = vadd.f32 %v364, %v419
        %v428 = vadd.f32 %v365, %v420
        %v429 = vadd.f32 %v366, %v421
        %v430 = vadd.f32 %v367, %v422
        %v431 = vtanh.pop %v387
        %v432 = vtanh.pop %v388
        %v433 = vtanh.pop %v389
        %v434 = vtanh.pop %v390
        %v435 = vtanh.pop %v391
        %v436 = vtanh.pop %v392
        %v437 = vtanh.pop %v393
        %v438 = vtanh.pop %v394
        %v439 = vmul.f32 %v431, 0.5
        %v440 = vmul.f32 %v432, 0.5
        %v441 = vmul.f32 %v433, 0.5
        %v442 = vmul.f32 %v434, 0.5
        %v443 = vmul.f32 %v435, 0.5
        %v444 = vmul.f32 %v436, 0.5
        %v445 = vmul.f32 %v437, 0.5
        %v446 = vmul.f32 %v438, 0.5
        %vm447 = vcmask 523264
        %448 = vst.msk [vmem:[%s202] sm:$0xff] %vm447, %v439
        %449 = vst.msk [vmem:[%s202 + $0x8] sm:$0xff] %vm447, %v440
        %450 = vst.msk [vmem:[%s202 + $0x10] sm:$0xff] %vm447, %v441
        %451 = vst.msk [vmem:[%s202 + $0x18] sm:$0xff] %vm447, %v442
        %452 = vst.msk [vmem:[%s202 + $0x20] sm:$0xff] %vm447, %v443
        %453 = vst.msk [vmem:[%s202 + $0x28] sm:$0xff] %vm447, %v444
        %454 = vst.msk [vmem:[%s202 + $0x30] sm:$0xff] %vm447, %v445
        %455 = vst.msk [vmem:[%s202 + $0x38] sm:$0xff] %vm447, %v446
        %v456 = vtanh.pop %v405
        %v457 = vtanh.pop %v406
        %v458 = vtanh.pop %v407
        %v459 = vtanh.pop %v408
        %v460 = vtanh.pop %v409
        %v461 = vtanh.pop %v410
        %v462 = vtanh.pop %v411
        %v463 = vtanh.pop %v412
        %v464 = vmul.f32 %v456, 0.5
        %v465 = vmul.f32 %v457, 0.5
        %v466 = vmul.f32 %v458, 0.5
        %v467 = vmul.f32 %v459, 0.5
        %v468 = vmul.f32 %v460, 0.5
        %v469 = vmul.f32 %v461, 0.5
        %v470 = vmul.f32 %v462, 0.5
        %v471 = vmul.f32 %v463, 0.5
        %s472 = scalar_lea.vmem %s202, 64
        %473 = vst.msk [vmem:[%s472] sm:$0xff] %vm447, %v464
        %474 = vst.msk [vmem:[%s472 + $0x8] sm:$0xff] %vm447, %v465
        %475 = vst.msk [vmem:[%s472 + $0x10] sm:$0xff] %vm447, %v466
        %476 = vst.msk [vmem:[%s472 + $0x18] sm:$0xff] %vm447, %v467
        %477 = vst.msk [vmem:[%s472 + $0x20] sm:$0xff] %vm447, %v468
        %478 = vst.msk [vmem:[%s472 + $0x28] sm:$0xff] %vm447, %v469
        %479 = vst.msk [vmem:[%s472 + $0x30] sm:$0xff] %vm447, %v470
        %480 = vst.msk [vmem:[%s472 + $0x38] sm:$0xff] %vm447, %v471
        %v481 = vtanh.pop %v423
        %v482 = vtanh.pop %v424
        %v483 = vtanh.pop %v425
        %v484 = vtanh.pop %v426
        %v485 = vtanh.pop %v427
        %v486 = vtanh.pop %v428
        %v487 = vtanh.pop %v429
        %v488 = vtanh.pop %v430
        %v489 = vmul.f32 %v481, 0.5
        %v490 = vmul.f32 %v482, 0.5
        %v491 = vmul.f32 %v483, 0.5
        %v492 = vmul.f32 %v484, 0.5
        %v493 = vmul.f32 %v485, 0.5
        %v494 = vmul.f32 %v486, 0.5
        %v495 = vmul.f32 %v487, 0.5
        %v496 = vmul.f32 %v488, 0.5
        %s497 = scalar_lea.vmem %s202, 128
        %498 = vst.msk [vmem:[%s497] sm:$0xff] %vm447, %v489
        %499 = vst.msk [vmem:[%s497 + $0x8] sm:$0xff] %vm447, %v490
        %500 = vst.msk [vmem:[%s497 + $0x10] sm:$0xff] %vm447, %v491
        %501 = vst.msk [vmem:[%s497 + $0x18] sm:$0xff] %vm447, %v492
        %502 = vst.msk [vmem:[%s497 + $0x20] sm:$0xff] %vm447, %v493
        %503 = vst.msk [vmem:[%s497 + $0x28] sm:$0xff] %vm447, %v494
        %504 = vst.msk [vmem:[%s497 + $0x30] sm:$0xff] %vm447, %v495
        %505 = vst.msk [vmem:[%s497 + $0x38] sm:$0xff] %vm447, %v496
        %s506 = smul.u32 2, %s22
        %p507 = scmp.lt.s32.totalorder %s21, 1
        %s508 = scalar_select %p507, %s21, 1
        %p509 = scmp.lt.s32.totalorder %s506, 1
        %s510 = scalar_select %p509, %s506, 1
        %s511 = smul.addr %s508, 24
        %s512 = sadd.s32 %s510, %s511
        %s513 = smul.addr %s512, 8
        %s514 = scalar_lea.vmem %s2, %s513
        // Predicated region
        $region37: #{_forward_phase.1} parent=27 // pred_check
          %p515 = pneg %p98
        $region38: #{_forward_phase.1} parent=27 // pred_check_branch
          %517 = sbr.rel (%p515) target = $region40
        $region39: #{_forward_phase.1} parent=27 // pred_region
          %s518 = smul.u32 2, %s22
        $region40: #{_forward_phase.1} parent=27 // pred_fallthru
          _
      $region28: #{_forward_phase.1} parent=5 // pred_fallthru
        _
      %p519 = scmp.le.s32.totalorder 2, %s12
      // Predicated region
      $region41: #{_forward_phase.1} parent=5 // pred_check
        %p520 = pneg %p519
      $region42: #{_forward_phase.1} parent=5 // pred_check_branch
        %522 = sbr.rel (%p520) target = $region44
      $region43: #{_forward_phase.1} parent=5 // pred_region
        %s523 = ssub.s32 %s12, 2
        // Predicated region
        $region45: #{_forward_phase.1} parent=43 // pred_check
          %p524 = pneg %p104
        $region46: #{_forward_phase.1} parent=43 // pred_check_branch
          %526 = sbr.rel (%p524) target = $region48
        $region47: #{_forward_phase.1} parent=43 // pred_region
          %s527 = smul.u32 2, %s24
          %p528 = scmp.lt.s32.totalorder %s23, 1
          %s529 = scalar_select %p528, %s23, 1
          %p530 = scmp.lt.s32.totalorder %s527, 1
          %s531 = scalar_select %p530, %s527, 1
          %s532 = smul.addr %s529, 24
          %s533 = sadd.s32 %s531, %s532
          %s534 = smul.addr %s533, 8
          %s535 = scalar_lea.vmem %s2, %s534
        $region48: #{_forward_phase.1} parent=43 // pred_fallthru
          _
      $region44: #{_forward_phase.1} parent=5 // pred_fallthru
        _
    $region6: #{_forward_phase.1} parent=1 // loop_footer
      %s16 = sadd.s32 1, %s12
    $region7: #{_forward_phase.1} parent=1 // loop_footer_branch
      %11 = sbr.rel target = $region3
    $region8: #{_forward_phase.1} parent=1 // loop_exit
      _
    %536 = vsyncpa [#allocation3], 1
    %s537 = scalar_lea.sflag [#allocation3], 1
    %538 = vsyncpa %s537, 1
    %539 = vsyncpa [#allocation4], 1
    %s540 = scalar_lea.sflag [#allocation4], 1
    %541 = vsyncpa %s540, 1

</llo_original>
